<compile_context>
chip_gen: v7x
topology: tpu7x:2x2x1
jax: 0.10.0
libtpu: 0.0.40
codegen_flags: <defaults>
</compile_context>

<pallas_src>
import functools

import jax
import jax.numpy as jnp
from jax import lax
from jax.experimental import pallas as pl
from jax.experimental.pallas import tpu as pltpu


def _dsc_kernel(x_ref, w_ref, b_ref, o_ref, *, K, stride, Wp, TH, L_pad, n_ht):
    # x_ref: (1, c_in_pad, Hp*Wp)  whole padded image, channel-major, flat spatial on lanes
    # w_ref: (c_out, K*K*c_in_pad) fused depthwise*pointwise weights (tap-major, channel-minor)
    # b_ref: (c_out, 1)            fused bias (f32)
    # o_ref: (1, 1, c_out, L_pad)  lane-dense output tile (flattened "wide" rows, 128-padded)
    if n_ht == 1:
        base = 0                                   # fully static slicing in the common case
    else:
        base = pl.program_id(1) * (TH * stride * Wp)

    taps = []
    for kh in range(K):
        for kw in range(K):
            s = kh * Wp + kw
            if stride == 1:
                taps.append(x_ref[0, :, pl.ds(base + s, L_pad)])
            else:
                # TODO(synk): strided lane reads (stride > 1) use the same index
                # algebra but are untested / may lower poorly on Mosaic.
                taps.append(x_ref[0, :, pl.ds(base + s, L_pad, stride=stride)])

    # im2col in registers: (K*K*c_in_pad, L_pad); pieces are 8-row aligned.
    col = jnp.concatenate(taps, axis=0)
    acc = jnp.dot(w_ref[...], col, preferred_element_type=jnp.float32)   # (c_out, L_pad) f32
    o_ref[0, 0] = (acc + b_ref[...]).astype(o_ref.dtype)


def _round_up(x, m):
    return (x + m - 1) // m * m


def _pick_tile_h(h_out, wp, max_lanes=8192):
    """Largest divisor of h_out whose (wide-row) output tile fits max_lanes lanes."""
    best = 1
    for d in range(1, h_out + 1):
        if h_out % d == 0 and d * wp <= max_lanes:
            best = d
    return best


def dsc_forward(x_nchw, dw_weight, dw_bias, pw_weight, pw_bias,
                *, stride=1, padding=1):
    """Pallas DSC forward. x_nchw: (N, c_in, H, W) -> (N, c_out, H_out, W_out)."""
    N, c_in, H_in, W_in = x_nchw.shape
    c_out = pw_weight.shape[0]
    K = dw_weight.shape[-1]
    H_out = (H_in + 2 * padding - K) // stride + 1
    W_out = (W_in + 2 * padding - K) // stride + 1
    Wp = W_in + 2 * padding
    Hp0 = H_in + 2 * padding
    c_in_pad = _round_up(c_in, 8)        # sublane-aligned channel block -> aligned im2col concat
    compute_dtype = x_nchw.dtype         # bf16 inputs feed the MXU natively; f32 stays accurate

    # --- fused weights / bias (f32 math, once, in the wrapper) --------------
    dw = dw_weight.reshape(c_in, K * K).astype(jnp.float32)             # (c_in, taps)
    pw = pw_weight.reshape(c_out, c_in).astype(jnp.float32)             # (c_out, c_in)
    fused = dw.T[:, None, :] * pw[None, :, :]                            # (taps, c_out, c_in)
    fused = jnp.pad(fused, ((0, 0), (0, 0), (0, c_in_pad - c_in)))       # zero-pad channels
    fused_w2d = jnp.transpose(fused, (1, 0, 2)).reshape(
        c_out, K * K * c_in_pad).astype(compute_dtype)                   # (c_out, taps*c_in_pad)
    fused_b = (pw @ dw_bias.astype(jnp.float32)
               + pw_bias.astype(jnp.float32)).reshape(c_out, 1)          # (c_out, 1), f32

    # --- output tiling over rows (largest divisor -> fewest grid steps) -----
    TH = _pick_tile_h(H_out, Wp)
    n_ht = H_out // TH
    L_out = TH * Wp                          # valid flattened ("wide"-row) tile width
    L_pad = _round_up(L_out, 128)            # lane-dense stores (no masked vst tails)

    # Pad the image so every tap's L_pad-long lane slice stays in bounds (the
    # extra rows are zeros; the corresponding output columns are sliced away).
    s_max = (K - 1) * Wp + (K - 1)
    max_read = (n_ht - 1) * TH * stride * Wp + s_max + stride * (L_pad - 1)
    need_rows = -(-(max_read + 1) // Wp)
    extra_rows = max(0, need_rows - Hp0)
    Hp = Hp0 + extra_rows
    flat_len = Hp * Wp

    # TODO(synk): for images too large to hold one padded (c_in_pad, Hp*Wp) slab in
    # VMEM, switch to memory_space=pl.ANY + manual halo'd-slab DMA (make_async_copy).
    x_pad = jnp.pad(x_nchw, ((0, 0), (0, c_in_pad - c_in),
                             (padding, padding + extra_rows),
                             (padding, padding)))
    x_flat = x_pad.reshape(N, c_in_pad, flat_len).astype(compute_dtype)

    kernel = functools.partial(_dsc_kernel, K=K, stride=stride, Wp=Wp,
                               TH=TH, L_pad=L_pad, n_ht=n_ht)

    out = pl.pallas_call(
        kernel,
        out_shape=jax.ShapeDtypeStruct((N, n_ht, c_out, L_pad), x_nchw.dtype),
        grid=(N, n_ht),
        in_specs=[
            # Whole padded image for batch element n; block index is constant along
            # the t axis, so it is DMA'd once per image (no halo duplication).
            pl.BlockSpec((1, c_in_pad, flat_len), lambda n, t: (n, 0, 0)),
            pl.BlockSpec((c_out, K * K * c_in_pad), lambda n, t: (0, 0)),   # resident
            pl.BlockSpec((c_out, 1), lambda n, t: (0, 0)),                  # resident
        ],
        out_specs=pl.BlockSpec((1, 1, c_out, L_pad), lambda n, t: (n, t, 0, 0)),
        compiler_params=pltpu.CompilerParams(
            dimension_semantics=("parallel", "parallel"),
            vmem_limit_bytes=32 * 1024 * 1024),   # safe on v5e/v6e/v7x; usage here is ~100 KiB
    )(x_flat, fused_w2d, fused_b)

    # Re-assemble NCHW: drop lane padding, split wide rows, drop right-pad columns.
    out = out[..., :L_out].reshape(N, n_ht, c_out, TH, Wp)
    out = jnp.transpose(out, (0, 2, 1, 3, 4)).reshape(N, c_out, H_out, Wp)
    return out[:, :, :, :W_out]


def dsc_reference(x_nchw, dw_weight, dw_bias, pw_weight, pw_bias,
                  *, stride=1, padding=1):
    """Pure-JAX reference (lax conv) matching PyTorch nn.Conv2d semantics."""
    c_in = x_nchw.shape[1]
    dw = lax.conv_general_dilated(
        x_nchw, dw_weight, window_strides=(stride, stride),
        padding=[(padding, padding), (padding, padding)],
        feature_group_count=c_in,
        dimension_numbers=("NCHW", "OIHW", "NCHW"),
        precision=lax.Precision.HIGHEST)
    dw = dw + dw_bias[None, :, None, None]
    pw = lax.conv_general_dilated(
        dw, pw_weight, window_strides=(1, 1), padding=[(0, 0), (0, 0)],
        dimension_numbers=("NCHW", "OIHW", "NCHW"),
        precision=lax.Precision.HIGHEST)
    return pw + pw_bias[None, :, None, None]


if __name__ == "__main__":
    # Small shapes consistent with the module: batch=2, c_in=4, c_out=8, 16x16.
    N, C_IN, C_OUT, H, W, K = 2, 4, 8, 16, 16, 3

    key = jax.random.PRNGKey(0)
    kx, k1, k2, k3, k4 = jax.random.split(key, 5)

    x = jax.random.normal(kx, (N, C_IN, H, W), jnp.float32)

    # Deterministic parameter init (shapes match nn.Conv2d in DSC.__init__).
    dw_weight = 0.1 * jax.random.normal(k1, (C_IN, 1, K, K), jnp.float32)  # groups=c_in
    dw_bias = 0.1 * jax.random.normal(k2, (C_IN,), jnp.float32)
    pw_weight = 0.1 * jax.random.normal(k3, (C_OUT, C_IN, 1, 1), jnp.float32)
    pw_bias = 0.1 * jax.random.normal(k4, (C_OUT,), jnp.float32)

    # f32 activations -> accurate MXU path, tight tolerance.
    out = jax.block_until_ready(
        dsc_forward(x, dw_weight, dw_bias, pw_weight, pw_bias, stride=1, padding=1))
    ref = dsc_reference(x, dw_weight, dw_bias, pw_weight, pw_bias, stride=1, padding=1)
    assert out.shape == (N, C_OUT, H, W), out.shape
    assert jnp.allclose(out, ref, rtol=1e-3, atol=1e-5), \
        float(jnp.max(jnp.abs(out - ref)))

    # bf16 activations -> native bf16 MXU path; tolerance loosened for bf16 rounding.
    x_bf16 = x.astype(jnp.bfloat16)
    out_bf16 = jax.block_until_ready(
        dsc_forward(x_bf16, dw_weight, dw_bias, pw_weight, pw_bias, stride=1, padding=1))
    ref_bf16 = dsc_reference(x_bf16.astype(jnp.float32), dw_weight, dw_bias,
                             pw_weight, pw_bias, stride=1, padding=1)
    assert out_bf16.shape == (N, C_OUT, H, W), out_bf16.shape
    assert jnp.allclose(out_bf16.astype(jnp.float32), ref_bf16, rtol=5e-2, atol=5e-2), \
        float(jnp.max(jnp.abs(out_bf16.astype(jnp.float32) - ref_bf16)))

    print("KERNEL_OK")
</pallas_src>

<mosaic_0001>
module attributes {stable_mosaic.version = 11 : i64} {
  func.func @_dsc_kernel(%arg0: i32, %arg1: i32, %arg2: memref<1x8x432xf32, #tpu.memory_space<vmem>>, %arg3: memref<8x72xf32, #tpu.memory_space<vmem>>, %arg4: memref<8x1xf32, #tpu.memory_space<vmem>>, %arg5: memref<1x1x8x384xf32, #tpu.memory_space<vmem>>) attributes {dimension_semantics = [#tpu.dimension_semantics<parallel>, #tpu.dimension_semantics<parallel>], iteration_bounds = array<i64: 2, 1>, scalar_prefetch = 0 : i64, scratch_operands = 0 : i64, tpu.core_type = #tpu.core_type<tc>, window_params = [{transform_indices = @transform_0, window_bounds = array<i64: 1, 8, 432>}, {pipeline_mode = #tpu.pipeline_mode<synchronous>, transform_indices = @transform_1, window_bounds = array<i64: 8, 72>}, {pipeline_mode = #tpu.pipeline_mode<synchronous>, transform_indices = @transform_2, window_bounds = array<i64: 8, 1>}, {transform_indices = @transform_3, window_bounds = array<i64: 1, 1, 8, 384>}]} {
    %c0 = arith.constant 0 : index
    %c0_0 = arith.constant 0 : index
    %c0_1 = arith.constant 0 : index
    %0 = vector.load %arg2[%c0, %c0_0, %c0_1] : memref<1x8x432xf32, #tpu.memory_space<vmem>>, vector<1x8x384xf32>
    %1 = vector.shape_cast %0 : vector<1x8x384xf32> to vector<8x384xf32>
    %c0_2 = arith.constant 0 : index
    %c0_3 = arith.constant 0 : index
    %c1 = arith.constant 1 : index
    %2 = vector.load %arg2[%c0_2, %c0_3, %c1] : memref<1x8x432xf32, #tpu.memory_space<vmem>>, vector<1x8x384xf32>
    %3 = vector.shape_cast %2 : vector<1x8x384xf32> to vector<8x384xf32>
    %c0_4 = arith.constant 0 : index
    %c0_5 = arith.constant 0 : index
    %c2 = arith.constant 2 : index
    %4 = vector.load %arg2[%c0_4, %c0_5, %c2] : memref<1x8x432xf32, #tpu.memory_space<vmem>>, vector<1x8x384xf32>
    %5 = vector.shape_cast %4 : vector<1x8x384xf32> to vector<8x384xf32>
    %c0_6 = arith.constant 0 : index
    %c0_7 = arith.constant 0 : index
    %c18 = arith.constant 18 : index
    %6 = vector.load %arg2[%c0_6, %c0_7, %c18] : memref<1x8x432xf32, #tpu.memory_space<vmem>>, vector<1x8x384xf32>
    %7 = vector.shape_cast %6 : vector<1x8x384xf32> to vector<8x384xf32>
    %c0_8 = arith.constant 0 : index
    %c0_9 = arith.constant 0 : index
    %c19 = arith.constant 19 : index
    %8 = vector.load %arg2[%c0_8, %c0_9, %c19] : memref<1x8x432xf32, #tpu.memory_space<vmem>>, vector<1x8x384xf32>
    %9 = vector.shape_cast %8 : vector<1x8x384xf32> to vector<8x384xf32>
    %c0_10 = arith.constant 0 : index
    %c0_11 = arith.constant 0 : index
    %c20 = arith.constant 20 : index
    %10 = vector.load %arg2[%c0_10, %c0_11, %c20] : memref<1x8x432xf32, #tpu.memory_space<vmem>>, vector<1x8x384xf32>
    %11 = vector.shape_cast %10 : vector<1x8x384xf32> to vector<8x384xf32>
    %c0_12 = arith.constant 0 : index
    %c0_13 = arith.constant 0 : index
    %c36 = arith.constant 36 : index
    %12 = vector.load %arg2[%c0_12, %c0_13, %c36] : memref<1x8x432xf32, #tpu.memory_space<vmem>>, vector<1x8x384xf32>
    %13 = vector.shape_cast %12 : vector<1x8x384xf32> to vector<8x384xf32>
    %c0_14 = arith.constant 0 : index
    %c0_15 = arith.constant 0 : index
    %c37 = arith.constant 37 : index
    %14 = vector.load %arg2[%c0_14, %c0_15, %c37] : memref<1x8x432xf32, #tpu.memory_space<vmem>>, vector<1x8x384xf32>
    %15 = vector.shape_cast %14 : vector<1x8x384xf32> to vector<8x384xf32>
    %c0_16 = arith.constant 0 : index
    %c0_17 = arith.constant 0 : index
    %c38 = arith.constant 38 : index
    %16 = vector.load %arg2[%c0_16, %c0_17, %c38] : memref<1x8x432xf32, #tpu.memory_space<vmem>>, vector<1x8x384xf32>
    %17 = vector.shape_cast %16 : vector<1x8x384xf32> to vector<8x384xf32>
    %18 = tpu.concatenate %1, %3, %5, %7, %9, %11, %13, %15, %17 in 0 : vector<8x384xf32>, vector<8x384xf32>, vector<8x384xf32>, vector<8x384xf32>, vector<8x384xf32>, vector<8x384xf32>, vector<8x384xf32>, vector<8x384xf32>, vector<8x384xf32> -> vector<72x384xf32>
    %c0_18 = arith.constant 0 : index
    %c0_19 = arith.constant 0 : index
    %19 = vector.load %arg3[%c0_18, %c0_19] : memref<8x72xf32, #tpu.memory_space<vmem>>, vector<8x72xf32>
    %cst = arith.constant dense<0.000000e+00> : vector<8x384xf32>
    %20 = tpu.matmul %19, %18, %cst {dimension_numbers = #tpu.dot_dimension_numbers<[1], [0], [0], [1], [0, 0, 1, 1], [], []>} : vector<8x72xf32>, vector<72x384xf32>, vector<8x384xf32> -> vector<8x384xf32>
    %c0_20 = arith.constant 0 : index
    %c0_21 = arith.constant 0 : index
    %21 = vector.load %arg4[%c0_20, %c0_21] : memref<8x1xf32, #tpu.memory_space<vmem>>, vector<8x1xf32>
    %22 = vector.broadcast %21 : vector<8x1xf32> to vector<8x384xf32>
    %23 = arith.addf %20, %22 : vector<8x384xf32>
    %c0_22 = arith.constant 0 : index
    %c0_23 = arith.constant 0 : index
    %c0_24 = arith.constant 0 : index
    %c0_25 = arith.constant 0 : index
    %24 = vector.load %arg5[%c0_22, %c0_23, %c0_24, %c0_25] : memref<1x1x8x384xf32, #tpu.memory_space<vmem>>, vector<1x1x8x384xf32>
    %25 = vector.shape_cast %24 : vector<1x1x8x384xf32> to vector<8x384xf32>
    %26 = vector.shape_cast %23 : vector<8x384xf32> to vector<1x1x8x384xf32>
    tpu.vector_store %arg5[%c0_22, %c0_23, %c0_24, %c0_25], %26 {strides = array<i32>} : memref<1x1x8x384xf32, #tpu.memory_space<vmem>>, vector<1x1x8x384xf32>,
    return
  }
  func.func @transform_0(%arg0: i32, %arg1: i32) -> (i32, i32, i32) {
    %c0_i32 = arith.constant 0 : i32
    %c0_i32_0 = arith.constant 0 : i32
    %c0_i32_1 = arith.constant 0 : i32
    return %arg0, %c0_i32, %c0_i32_0 : i32, i32, i32
  }
  func.func @transform_1(%arg0: i32, %arg1: i32) -> (i32, i32) {
    %c0_i32 = arith.constant 0 : i32
    %c0_i32_0 = arith.constant 0 : i32
    %c0_i32_1 = arith.constant 0 : i32
    return %c0_i32, %c0_i32_0 : i32, i32
  }
  func.func @transform_2(%arg0: i32, %arg1: i32) -> (i32, i32) {
    %c0_i32 = arith.constant 0 : i32
    %c0_i32_0 = arith.constant 0 : i32
    %c0_i32_1 = arith.constant 0 : i32
    return %c0_i32, %c0_i32_0 : i32, i32
  }
  func.func @transform_3(%arg0: i32, %arg1: i32) -> (i32, i32, i32, i32) {
    %c0_i32 = arith.constant 0 : i32
    %c0_i32_0 = arith.constant 0 : i32
    %c0_i32_1 = arith.constant 0 : i32
    return %arg0, %arg1, %c0_i32, %c0_i32_0 : i32, i32, i32, i32
  }
}

</mosaic_0001>

<llo_original>
// kernel: tpu_custom_call.1
$region0: #{tpu_custom_call.1}
  #allocation0 [shape = 'u32[]', space=smem, size = 0x4, offset = 0x4, fixed_abs, tag = 'smem constant byte address 0x4 - core index']
  #allocation1 [shape = 'u32[144,128]{1,0:T(1,128)}', space=vmem, size = 0x12000, scoped, tag = 'internal scratch']
  %s0 = inlined_call_operand.hbm [shape: f32[2,8,432], index: 0, kind: input, shape index: {}]
  %s1 = inlined_call_operand.vmem [shape: f32[8,72], index: 1, kind: input, shape index: {}]
  %s2 = inlined_call_operand.vmem [shape: f32[8,1], index: 2, kind: input, shape index: {}]
  %s3 = inlined_call_operand.hbm [shape: f32[2,1,8,384], index: 3, kind: output, shape index: {}]
  %s4 = sld [smem:[#allocation0]]
  $region49: #{tpu_custom_call.1} parent=0
    _
  %s6 = ssub.s32 1, %s4
  %s7 = scalar_select 0, %s6, %s4
  $region1: #{tpu_custom_call.1} parent=0
    #allocation2 [shape = 'u8[32768]{0}', space=vmem, size = 0x8000, scoped, tag = 'input window, operand 0']
    #allocation3 [shape = 's32[2]{0}', space=sflag, size = 0x8, scoped, tag = 'scoped memory for tpu_custom_call.1']
    #allocation4 [shape = 's32[2]{0}', space=sflag, size = 0x8, scoped, tag = 'scoped memory for tpu_custom_call.1']
    #allocation5 [shape = 'u8[24576]{0}', space=vmem, size = 0x6000, scoped, tag = 'output window, operand 0']
    %8 = vsyncpa [#allocation3], 0
    %s9 = scalar_lea.sflag [#allocation3], 1
    %10 = vsyncpa %s9, 0
    %11 = vsyncpa [#allocation4], 0
    %s12 = scalar_lea.sflag [#allocation4], 1
    %13 = vsyncpa %s12, 0
    loop: start=0, step=1, limit=4
    $region2: #{tpu_custom_call.1} parent=1 // loop_pre_header
      _
    $region3: #{tpu_custom_call.1} parent=1 // loop_header
      %s15 = sphi 0, %s19
      %p16 = scmp.ge.s32.totalorder %s15, 4
      %s22 = sphi 0, %s34
      %s23 = sphi 0, %s30
      %s24 = sphi 0, %s22
      %s25 = sphi 0, %s23
      %s26 = sphi 0, %s24
      %s27 = sphi 0, %s25
      %s37 = sphi 0, %s39
      %s40 = sphi 0, %s37
      %s41 = sphi 0, %s40
      %s57 = sphi 0, %s41
      %s61 = sphi 0, %s61
      %s63 = sphi 0, %s61
      %s64 = sphi 0, %s63
      %s78 = sphi 0, %s64
      %s82 = sphi 0, %s82
      %s84 = sphi 0, %s82
      %s85 = sphi 0, %s84
      %s99 = sphi 0, %s85
      %s107 = sphi 0, %s109
      %s110 = sphi 0, %s107
      %s111 = sphi 0, %s110
      %s127 = sphi 0, %s111
    $region4: #{tpu_custom_call.1} parent=1 // loop_header_branch
      %18 = sbr.rel (%p16) target = $region8
    $region5: #{tpu_custom_call.1} parent=1 // loop_body
      %s20 = ssub.s32 %s15, 1
      %s21 = ssub.s32 %s15, 2
      %s28 = sadd.s32 1, %s23
      %p29 = scmp.ge.s32.totalorder %s28, 1
      %s30 = scalar_select %p29, 0, %s28
      %s31 = sadd.s32 1, %s22
      %s32 = scalar_select %p29, %s31, %s22
      %p33 = scmp.ge.s32.totalorder %s32, 2
      %s34 = scalar_select %p33, 0, %s32
      %s35 = ssub.s32 %s22, %s34
      %p36 = scmp.eq.s32.totalorder %s35, 0
      %s38 = sadd.s32 %s37, 1
      %s39 = scalar_select %p36, %s37, %s38
      %p42 = pneg %p36
      %p43 = scmp.eq.s32.totalorder %s15, 1
      %p44 = por %p42, %p43
      %p45 = scmp.ne.s32.totalorder %s37, %s40
      %p46 = scmp.eq.s32.totalorder %s15, 0
      %p47 = por %p45, %p46
      %p48 = scmp.ne.s32.totalorder %s37, %s40
      %p49 = scmp.eq.s32.totalorder %s20, 1
      %p50 = por %p48, %p49
      %p51 = scmp.ne.s32.totalorder %s40, %s41
      %p52 = scmp.eq.s32.totalorder %s20, 0
      %p53 = por %p51, %p52
      %p54 = scmp.ne.s32.totalorder %s40, %s41
      %p55 = scmp.eq.s32.totalorder %s21, 1
      %p56 = por %p54, %p55
      %p58 = scmp.ne.s32.totalorder %s41, %s57
      %p59 = scmp.eq.s32.totalorder %s21, 0
      %p60 = por %p58, %p59
      %s62 = sadd.s32 %s61, 1
      %p65 = scmp.eq.s32.totalorder %s15, 1
      %p66 = scmp.ne.s32.totalorder %s61, %s63
      %p67 = scmp.eq.s32.totalorder %s15, 0
      %p68 = por %p66, %p67
      %p69 = scmp.ne.s32.totalorder %s61, %s63
      %p70 = scmp.eq.s32.totalorder %s20, 1
      %p71 = por %p69, %p70
      %p72 = scmp.ne.s32.totalorder %s63, %s64
      %p73 = scmp.eq.s32.totalorder %s20, 0
      %p74 = por %p72, %p73
      %p75 = scmp.ne.s32.totalorder %s63, %s64
      %p76 = scmp.eq.s32.totalorder %s21, 1
      %p77 = por %p75, %p76
      %p79 = scmp.ne.s32.totalorder %s64, %s78
      %p80 = scmp.eq.s32.totalorder %s21, 0
      %p81 = por %p79, %p80
      %s83 = sadd.s32 %s82, 1
      %p86 = scmp.eq.s32.totalorder %s15, 1
      %p87 = scmp.ne.s32.totalorder %s82, %s84
      %p88 = scmp.eq.s32.totalorder %s15, 0
      %p89 = por %p87, %p88
      %p90 = scmp.ne.s32.totalorder %s82, %s84
      %p91 = scmp.eq.s32.totalorder %s20, 1
      %p92 = por %p90, %p91
      %p93 = scmp.ne.s32.totalorder %s84, %s85
      %p94 = scmp.eq.s32.totalorder %s20, 0
      %p95 = por %p93, %p94
      %p96 = scmp.ne.s32.totalorder %s84, %s85
      %p97 = scmp.eq.s32.totalorder %s21, 1
      %p98 = por %p96, %p97
      %p100 = scmp.ne.s32.totalorder %s85, %s99
      %p101 = scmp.eq.s32.totalorder %s21, 0
      %p102 = por %p100, %p101
      %s103 = ssub.s32 %s22, %s34
      %s104 = ssub.s32 %s23, %s30
      %s105 = sor.u32 %s103, %s104
      %p106 = scmp.eq.s32.totalorder %s105, 0
      %s108 = sadd.s32 %s107, 1
      %s109 = scalar_select %p106, %s107, %s108
      %p112 = pneg %p106
      %p113 = scmp.eq.s32.totalorder %s15, 1
      %p114 = por %p112, %p113
      %p115 = scmp.ne.s32.totalorder %s107, %s110
      %p116 = scmp.eq.s32.totalorder %s15, 0
      %p117 = por %p115, %p116
      %p118 = scmp.ne.s32.totalorder %s107, %s110
      %p119 = scmp.eq.s32.totalorder %s20, 1
      %p120 = por %p118, %p119
      %p121 = scmp.ne.s32.totalorder %s110, %s111
      %p122 = scmp.eq.s32.totalorder %s20, 0
      %p123 = por %p121, %p122
      %p124 = scmp.ne.s32.totalorder %s110, %s111
      %p125 = scmp.eq.s32.totalorder %s21, 1
      %p126 = por %p124, %p125
      %p128 = scmp.ne.s32.totalorder %s111, %s127
      %p129 = scmp.eq.s32.totalorder %s21, 0
      %p130 = por %p128, %p129
      %p131 = scmp.le.s32.totalorder 1, %s15
      %p132 = scmp.lt.s32.totalorder %s15, 3
      %p133 = pnand %p131, %p132
      %p134 = pneg %p133
      // Predicated region
      $region9: #{tpu_custom_call.1} parent=5 // pred_check
        _
      $region10: #{tpu_custom_call.1} parent=5 // pred_check_branch
        %136 = sbr.rel (%p133) target = $region12
      $region11: #{tpu_custom_call.1} parent=5 // pred_region
        %s137 = ssub.s32 %s15, 1
        // Predicated region
        $region13: #{tpu_custom_call.1} parent=11 // pred_check
          %p138 = pneg %p74
        $region14: #{tpu_custom_call.1} parent=11 // pred_check_branch
          %140 = sbr.rel (%p138) target = $region16
        $region15: #{tpu_custom_call.1} parent=11 // pred_region
          _
        $region16: #{tpu_custom_call.1} parent=11 // pred_fallthru
          _
        // Predicated region
        $region17: #{tpu_custom_call.1} parent=11 // pred_check
          %p141 = pneg %p95
        $region18: #{tpu_custom_call.1} parent=11 // pred_check_branch
          %143 = sbr.rel (%p141) target = $region20
        $region19: #{tpu_custom_call.1} parent=11 // pred_region
          _
        $region20: #{tpu_custom_call.1} parent=11 // pred_fallthru
          _
      $region12: #{tpu_custom_call.1} parent=5 // pred_fallthru
        _
      %p144 = scmp.lt.s32.totalorder %s15, 2
      // Predicated region
      $region21: #{tpu_custom_call.1} parent=5 // pred_check
        %p145 = pneg %p144
      $region22: #{tpu_custom_call.1} parent=5 // pred_check_branch
        %147 = sbr.rel (%p145) target = $region24
      $region23: #{tpu_custom_call.1} parent=5 // pred_region
        // Predicated region
        $region25: #{tpu_custom_call.1} parent=23 // pred_check
          %p148 = pneg %p47
        $region26: #{tpu_custom_call.1} parent=23 // pred_check_branch
          %150 = sbr.rel (%p148) target = $region28
        $region27: #{tpu_custom_call.1} parent=23 // pred_region
          %s151 = sand.u32 %s37, 1
          %s152 = scalar_lea.sflag [#allocation3], %s151
          %s153 = sand.u32 %s37, 1
          %s154 = smul.addr %s153, 32
          %s155 = scalar_lea.vmem [#allocation2], %s154
          %s157 = ssub.s32 512, 512
          %158 = vsyncadd %s152, %s157
          %s159 = smul.addr %s22, 4
          %s160 = smul.addr %s159, 128
          %s161 = scalar_lea.hbm %s0, %s160
          %s163 = sshll.u32 %s155, 4
          %s164 = int_to_ptr.vmem [resolvable:$true] %s163
          %166 = dma.hbm_to_vmem [thread:$0]  %s161, 512, %s164, %s152
        $region28: #{tpu_custom_call.1} parent=23 // pred_fallthru
          _
      $region24: #{tpu_custom_call.1} parent=5 // pred_fallthru
        _
      %p167 = scmp.le.s32.totalorder 1, %s15
      %p168 = scmp.lt.s32.totalorder %s15, 3
      %p169 = pnand %p167, %p168
      %p170 = pneg %p169
      // Predicated region
      $region29: #{tpu_custom_call.1} parent=5 // pred_check
        _
      $region30: #{tpu_custom_call.1} parent=5 // pred_check_branch
        %172 = sbr.rel (%p169) target = $region32
      $region31: #{tpu_custom_call.1} parent=5 // pred_region
        %s173 = ssub.s32 %s15, 1
        %s174 = sand.u32 %s40, 1
        %s175 = scalar_lea.sflag [#allocation3], %s174
        %s176 = sand.u32 %s40, 1
        %s177 = smul.addr %s176, 32
        %s178 = scalar_lea.vmem [#allocation2], %s177
        // Predicated region
        $region33: #{tpu_custom_call.1} parent=31 // pred_check
          %p179 = pneg %p53
        $region34: #{tpu_custom_call.1} parent=31 // pred_check_branch
          %181 = sbr.rel (%p179) target = $region36
        $region35: #{tpu_custom_call.1} parent=31 // pred_region
          %182 = dma.done %s175, 512
        $region36: #{tpu_custom_call.1} parent=31 // pred_fallthru
          _
        %s183 = sand.u32 %s40, 1
        %s184 = scalar_lea.sflag [#allocation3], %s183
        %s185 = sand.u32 %s40, 1
        %s186 = smul.addr %s185, 32
        %s187 = scalar_lea.vmem [#allocation2], %s186
        %p188 = pneg %p53
        %p189 = pneg %p50
        %p190 = pneg %p74
        %p191 = pneg %p71
        %p192 = pneg %p95
        %p193 = pneg %p92
        %p194 = pneg %p123
        %p195 = pneg %p120
        %s196 = sand.u32 %s110, 1
        %s197 = scalar_lea.sflag [#allocation4], %s196
        %s198 = sand.u32 %s110, 1
        %s199 = smul.addr %s198, 24
        %s200 = scalar_lea.vmem [#allocation5], %s199
        %v201 = vld [vmem:[%s178] sm:$0xff]
        %v202 = vld [vmem:[%s178 + $0x8] sm:$0xff]
        %v203 = vld [vmem:[%s178 + $0x10] sm:$0xff]
        %v204 = vld [vmem:[%s178 + $0x18] sm:$0xff]
        %209 = vrot.lane.b32.xlu0 %v201, 127
        %v210 = vpop.permute.xlu0 %209
        %211 = vrot.lane.b32.xlu0 %v202, 127
        %v212 = vpop.permute.xlu0 %211
        %213 = vrot.lane.b32.xlu0 %v203, 127
        %v214 = vpop.permute.xlu0 %213
        %215 = vrot.lane.b32.xlu0 %v204, 127
        %v216 = vpop.permute.xlu0 %215
        %vm217 = vcmask 1039360
        %v218 = vsel %vm217, %v210, %v212
        %v219 = vsel %vm217, %v212, %v214
        %v220 = vsel %vm217, %v214, %v216
        %224 = vrot.lane.b32.xlu0 %v201, 126
        %v225 = vpop.permute.xlu0 %224
        %226 = vrot.lane.b32.xlu0 %v202, 126
        %v227 = vpop.permute.xlu0 %226
        %228 = vrot.lane.b32.xlu0 %v203, 126
        %v229 = vpop.permute.xlu0 %228
        %230 = vrot.lane.b32.xlu0 %v204, 126
        %v231 = vpop.permute.xlu0 %230
        %vm232 = vcmask 1031168
        %v233 = vsel %vm232, %v225, %v227
        %v234 = vsel %vm232, %v227, %v229
        %v235 = vsel %vm232, %v229, %v231
        %239 = vrot.lane.b32.xlu0 %v201, 110
        %v240 = vpop.permute.xlu0 %239
        %241 = vrot.lane.b32.xlu0 %v202, 110
        %v242 = vpop.permute.xlu0 %241
        %243 = vrot.lane.b32.xlu0 %v203, 110
        %v244 = vpop.permute.xlu0 %243
        %245 = vrot.lane.b32.xlu0 %v204, 110
        %v246 = vpop.permute.xlu0 %245
        %vm247 = vcmask 900096
        %v248 = vsel %vm247, %v240, %v242
        %v249 = vsel %vm247, %v242, %v244
        %v250 = vsel %vm247, %v244, %v246
        %254 = vrot.lane.b32.xlu0 %v201, 109
        %v255 = vpop.permute.xlu0 %254
        %256 = vrot.lane.b32.xlu0 %v202, 109
        %v257 = vpop.permute.xlu0 %256
        %258 = vrot.lane.b32.xlu0 %v203, 109
        %v259 = vpop.permute.xlu0 %258
        %260 = vrot.lane.b32.xlu0 %v204, 109
        %v261 = vpop.permute.xlu0 %260
        %vm262 = vcmask 891904
        %v263 = vsel %vm262, %v255, %v257
        %v264 = vsel %vm262, %v257, %v259
        %v265 = vsel %vm262, %v259, %v261
        %269 = vrot.lane.b32.xlu0 %v201, 108
        %v270 = vpop.permute.xlu0 %269
        %271 = vrot.lane.b32.xlu0 %v202, 108
        %v272 = vpop.permute.xlu0 %271
        %273 = vrot.lane.b32.xlu0 %v203, 108
        %v274 = vpop.permute.xlu0 %273
        %275 = vrot.lane.b32.xlu0 %v204, 108
        %v276 = vpop.permute.xlu0 %275
        %vm277 = vcmask 883712
        %v278 = vsel %vm277, %v270, %v272
        %v279 = vsel %vm277, %v272, %v274
        %v280 = vsel %vm277, %v274, %v276
        %284 = vrot.lane.b32.xlu0 %v201, 92
        %v285 = vpop.permute.xlu0 %284
        %286 = vrot.lane.b32.xlu0 %v202, 92
        %v287 = vpop.permute.xlu0 %286
        %288 = vrot.lane.b32.xlu0 %v203, 92
        %v289 = vpop.permute.xlu0 %288
        %290 = vrot.lane.b32.xlu0 %v204, 92
        %v291 = vpop.permute.xlu0 %290
        %vm292 = vcmask 752640
        %v293 = vsel %vm292, %v285, %v287
        %v294 = vsel %vm292, %v287, %v289
        %v295 = vsel %vm292, %v289, %v291
        %299 = vrot.lane.b32.xlu0 %v201, 91
        %v300 = vpop.permute.xlu0 %299
        %301 = vrot.lane.b32.xlu0 %v202, 91
        %v302 = vpop.permute.xlu0 %301
        %303 = vrot.lane.b32.xlu0 %v203, 91
        %v304 = vpop.permute.xlu0 %303
        %305 = vrot.lane.b32.xlu0 %v204, 91
        %v306 = vpop.permute.xlu0 %305
        %vm307 = vcmask 744448
        %v308 = vsel %vm307, %v300, %v302
        %v309 = vsel %vm307, %v302, %v304
        %v310 = vsel %vm307, %v304, %v306
        %314 = vrot.lane.b32.xlu0 %v201, 90
        %v315 = vpop.permute.xlu0 %314
        %316 = vrot.lane.b32.xlu0 %v202, 90
        %v317 = vpop.permute.xlu0 %316
        %318 = vrot.lane.b32.xlu0 %v203, 90
        %v319 = vpop.permute.xlu0 %318
        %320 = vrot.lane.b32.xlu0 %v204, 90
        %v321 = vpop.permute.xlu0 %320
        %vm322 = vcmask 736256
        %v323 = vsel %vm322, %v315, %v317
        %v324 = vsel %vm322, %v317, %v319
        %v325 = vsel %vm322, %v319, %v321
        %v329 = vld [vmem:[%s1] sm:$0xff]
        %v330 = vld [vmem:[%s2] sm:$0xff]
        %332 = vset.pattern.permute.xlu0 0
        %333 = vperm.xlu0 %332, %v330
        %v334 = vpop.permute.xlu0 %333
        %vm336 = vcmask 588800
        %v338 = vsel %vm336, %v329, 0
        %340 = vmatprep.subr.mxu0 %v202
        %341 = vmatpush1.msra.mxu0 %v201
        %342 = vmatprep.subr.mxu0 %v219
        %343 = vmatpush1.msra.mxu0 %v218
        %344 = vmatprep.subr.mxu0 %v234
        %345 = vmatpush1.msra.mxu0 %v233
        %346 = vmatprep.subr.mxu0 %v249
        %347 = vmatpush1.msra.mxu0 %v248
        %348 = vmatprep.subr.mxu0 %v264
        %349 = vmatpush1.msra.mxu0 %v263
        %350 = vmatprep.subr.mxu0 %v279
        %351 = vmatpush1.msra.mxu0 %v278
        %352 = vmatprep.subr.mxu0 %v294
        %353 = vmatpush1.msra.mxu0 %v293
        %354 = vmatprep.subr.mxu0 %v309
        %355 = vmatpush1.msra.mxu0 %v308
        %356 = vmatprep.subr.mxu0 %v324
        %357 = vmatpush1.msra.mxu0 %v323
        %358 = vmatprep.subr.mxu0 0.0
        %359 = vmatpush1.msra.mxu0 0.0
        %360 = vmatprep.subr.mxu0 0.0
        %361 = vmatpush1.msra.mxu0 0.0
        %362 = vmatprep.subr.mxu0 0.0
        %363 = vmatpush1.msra.mxu0 0.0
        %364 = vmatprep.subr.mxu0 0.0
        %365 = vmatpush1.msra.mxu0 0.0
        %366 = vmatprep.subr.mxu0 0.0
        %367 = vmatpush1.msra.mxu0 0.0
        %368 = vmatprep.subr.mxu0 0.0
        %369 = vmatpush1.msra.mxu0 0.0
        %370 = vmatprep.subr.mxu0 0.0
        %371 = vmatpush1.msra.mxu0 0.0
        %372 = vmatprep.subr.mxu0 0.0
        %373 = vmatpush1.msra.mxu0 0.0
        %374 = vmatprep.subr.mxu0 0.0
        %375 = vmatpush1.msra.mxu0 0.0
        %376 = vmatprep.subr.mxu0 0.0
        %377 = vmatpush1.msra.mxu0 0.0
        %378 = vmatprep.subr.mxu0 0.0
        %379 = vmatpush1.msra.mxu0 0.0
        %380 = vmatprep.subr.mxu0 0.0
        %381 = vmatpush1.msra.mxu0 0.0
        %382 = vmatprep.subr.mxu0 0.0
        %383 = vmatpush1.msra.mxu0 0.0
        %384 = vmatprep.subr.mxu0 0.0
        %385 = vmatpush1.msra.mxu0 0.0
        %386 = vmatprep.subr.mxu0 0.0
        %387 = vmatpush1.msra.mxu0 0.0
        %388 = vmatprep.subr.mxu0 0.0
        %389 = vmatpush1.msra.mxu0 0.0
        %390 = vmatprep.subr.mxu0 0.0
        %391 = vmatpush1.msra.mxu0 0.0
        %392 = vmatprep.subr.mxu0 0.0
        %393 = vmatpush1.msra.mxu0 0.0
        %394 = vmatprep.subr.mxu0 0.0
        %395 = vmatpush1.msra.mxu0 0.0
        %396 = vmatprep.subr.mxu0 0.0
        %397 = vmatpush1.msra.mxu0 0.0
        %398 = vmatprep.subr.mxu0 0.0
        %399 = vmatpush1.msra.mxu0 0.0
        %400 = vmatprep.subr.mxu0 0.0
        %401 = vmatpush1.msra.mxu0 0.0
        %402 = vmatprep.subr.mxu0 0.0
        %403 = vmatpush1.msra.mxu0 0.0
        %404 = vmatprep.mubr.f32.mxu0 0.0
        %405 = vmatmul.mubr.f32.gmra.mrb[0].mxu0 %v338
        %v406 = vpop.f32.mrb[0].mxu0
        %v407 = vadd.f32 %v334, %v406
        %v408 = vpop.f32.mrb[0].mxu0
        %v409 = vadd.f32 %v334, %v408
        %410 = vdwg.mxu0
        %411 = vmatprep.subr.mxu0 0.0
        %412 = vmatpush1.msra.mxu0 %v203
        %413 = vmatprep.subr.mxu0 0.0
        %414 = vmatpush1.msra.mxu0 %v220
        %415 = vmatprep.subr.mxu0 0.0
        %416 = vmatpush1.msra.mxu0 %v235
        %417 = vmatprep.subr.mxu0 0.0
        %418 = vmatpush1.msra.mxu0 %v250
        %419 = vmatprep.subr.mxu0 0.0
        %420 = vmatpush1.msra.mxu0 %v265
        %421 = vmatprep.subr.mxu0 0.0
        %422 = vmatpush1.msra.mxu0 %v280
        %423 = vmatprep.subr.mxu0 0.0
        %424 = vmatpush1.msra.mxu0 %v295
        %425 = vmatprep.subr.mxu0 0.0
        %426 = vmatpush1.msra.mxu0 %v310
        %427 = vmatprep.subr.mxu0 0.0
        %428 = vmatpush1.msra.mxu0 %v325
        %429 = vmatprep.subr.mxu0 0.0
        %430 = vmatpush1.msra.mxu0 0.0
        %431 = vmatprep.subr.mxu0 0.0
        %432 = vmatpush1.msra.mxu0 0.0
        %433 = vmatprep.subr.mxu0 0.0
        %434 = vmatpush1.msra.mxu0 0.0
        %435 = vmatprep.subr.mxu0 0.0
        %436 = vmatpush1.msra.mxu0 0.0
        %437 = vmatprep.subr.mxu0 0.0
        %438 = vmatpush1.msra.mxu0 0.0
        %439 = vmatprep.subr.mxu0 0.0
        %440 = vmatpush1.msra.mxu0 0.0
        %441 = vmatprep.subr.mxu0 0.0
        %442 = vmatpush1.msra.mxu0 0.0
        %443 = vmatprep.subr.mxu0 0.0
        %444 = vmatpush1.msra.mxu0 0.0
        %445 = vmatprep.subr.mxu0 0.0
        %446 = vmatpush1.msra.mxu0 0.0
        %447 = vmatprep.subr.mxu0 0.0
        %448 = vmatpush1.msra.mxu0 0.0
        %449 = vmatprep.subr.mxu0 0.0
        %450 = vmatpush1.msra.mxu0 0.0
        %451 = vmatprep.subr.mxu0 0.0
        %452 = vmatpush1.msra.mxu0 0.0
        %453 = vmatprep.subr.mxu0 0.0
        %454 = vmatpush1.msra.mxu0 0.0
        %455 = vmatprep.subr.mxu0 0.0
        %456 = vmatpush1.msra.mxu0 0.0
        %457 = vmatprep.subr.mxu0 0.0
        %458 = vmatpush1.msra.mxu0 0.0
        %459 = vmatprep.subr.mxu0 0.0
        %460 = vmatpush1.msra.mxu0 0.0
        %461 = vmatprep.subr.mxu0 0.0
        %462 = vmatpush1.msra.mxu0 0.0
        %463 = vmatprep.subr.mxu0 0.0
        %464 = vmatpush1.msra.mxu0 0.0
        %465 = vmatprep.subr.mxu0 0.0
        %466 = vmatpush1.msra.mxu0 0.0
        %467 = vmatprep.subr.mxu0 0.0
        %468 = vmatpush1.msra.mxu0 0.0
        %469 = vmatprep.subr.mxu0 0.0
        %470 = vmatpush1.msra.mxu0 0.0
        %471 = vmatprep.subr.mxu0 0.0
        %472 = vmatpush1.msra.mxu0 0.0
        %473 = vmatprep.subr.mxu0 0.0
        %474 = vmatpush1.msra.mxu0 0.0
        %475 = vmatprep.mubr.f32.mxu0 0.0
        %476 = vmatmul.mubr.f32.gmra.mrb[0].mxu0 %v338
        %v477 = vpop.f32.mrb[0].mxu0
        %v478 = vadd.f32 %v334, %v477
        %v479 = vpop.f32.mrb[0].mxu0
        %480 = vdwg.mxu0
        %481 = vst [vmem:[%s200] sm:$0xff] %v407
        %482 = vst [vmem:[%s200 + $0x8] sm:$0xff] %v409
        %483 = vst [vmem:[%s200 + $0x10] sm:$0xff] %v478
        %s484 = sand.u32 %s110, 1
        %s485 = scalar_lea.sflag [#allocation4], %s484
        %s486 = sand.u32 %s110, 1
        %s487 = smul.addr %s486, 24
        %s488 = scalar_lea.vmem [#allocation5], %s487
        // Predicated region
        $region37: #{tpu_custom_call.1} parent=31 // pred_check
          %p489 = pneg %p120
        $region38: #{tpu_custom_call.1} parent=31 // pred_check_branch
          %491 = sbr.rel (%p489) target = $region40
        $region39: #{tpu_custom_call.1} parent=31 // pred_region
          %s493 = ssub.s32 384, 384
          %494 = vsyncadd %s485, %s493
          %s495 = smul.addr %s25, 3
          %s496 = smul.addr %s24, 3
          %s497 = sadd.s32 %s495, %s496
          %s498 = smul.addr %s497, 128
          %s499 = scalar_lea.hbm %s3, %s498
          %s501 = sshll.u32 %s488, 4
          %s502 = int_to_ptr.vmem [resolvable:$true] %s501
          %504 = dma.vmem_to_hbm [thread:$0]  %s502, 384, %s499, %s485
        $region40: #{tpu_custom_call.1} parent=31 // pred_fallthru
          _
      $region32: #{tpu_custom_call.1} parent=5 // pred_fallthru
        _
      %p505 = scmp.le.s32.totalorder 2, %s15
      // Predicated region
      $region41: #{tpu_custom_call.1} parent=5 // pred_check
        %p506 = pneg %p505
      $region42: #{tpu_custom_call.1} parent=5 // pred_check_branch
        %508 = sbr.rel (%p506) target = $region44
      $region43: #{tpu_custom_call.1} parent=5 // pred_region
        %s509 = ssub.s32 %s15, 2
        // Predicated region
        $region45: #{tpu_custom_call.1} parent=43 // pred_check
          %p510 = pneg %p126
        $region46: #{tpu_custom_call.1} parent=43 // pred_check_branch
          %512 = sbr.rel (%p510) target = $region48
        $region47: #{tpu_custom_call.1} parent=43 // pred_region
          %s513 = sand.u32 %s111, 1
          %s514 = scalar_lea.sflag [#allocation4], %s513
          %s515 = sand.u32 %s111, 1
          %s516 = smul.addr %s515, 24
          %s517 = scalar_lea.vmem [#allocation5], %s516
          %518 = dma.done %s514, 384
        $region48: #{tpu_custom_call.1} parent=43 // pred_fallthru
          _
      $region44: #{tpu_custom_call.1} parent=5 // pred_fallthru
        _
    $region6: #{tpu_custom_call.1} parent=1 // loop_footer
      %s19 = sadd.s32 1, %s15
    $region7: #{tpu_custom_call.1} parent=1 // loop_footer_branch
      %14 = sbr.rel target = $region3
    $region8: #{tpu_custom_call.1} parent=1 // loop_exit
      _
    %519 = vsyncpa [#allocation3], 1
    %s520 = scalar_lea.sflag [#allocation3], 1
    %521 = vsyncpa %s520, 1
    %522 = vsyncpa [#allocation4], 1
    %s523 = scalar_lea.sflag [#allocation4], 1
    %524 = vsyncpa %s523, 1

</llo_original>
